<compile_context>
chip_gen: v7x
topology: tpu7x:2x2x1
jax: 0.10.0
libtpu: 0.0.40
codegen_flags: <defaults>
</compile_context>

<pallas_src>
import math

import jax
import jax.numpy as jnp
from jax.experimental import pallas as pl
from jax.experimental.pallas import tpu as pltpu


# ----------------------------- kernel ---------------------------------------

def _predictor_kernel(x_ref, w_ref, o_ref):
    # x_ref: (tile_m, K)  VMEM tile of (possibly lane-packed) input rows
    # w_ref: (K, N)       pre-transposed / block-diagonal weight, VMEM-resident
    # o_ref: (tile_m, N)
    o_ref[...] = jnp.dot(
        x_ref[...], w_ref[...], preferred_element_type=jnp.float32
    ).astype(o_ref.dtype)


# ----------------------------- tiling helpers --------------------------------

def _round_up(x, m):
    return ((x + m - 1) // m) * m


def _sublane_multiple(itemsize):
    # f32 -> 8, bf16 -> 16, int8/fp8 -> 32 (second-minor packing granularity)
    return max(8, 32 // max(1, itemsize))


_BUF_BUDGET_BYTES = 24 << 20   # double-buffered (x + out) tile budget per grid step
_MIN_GRID_STEPS = 8            # keep enough steps for v7x's two TensorCores
_MIN_TILE_ROWS = 1024          # never shrink tiles so far that step overhead dominates


def _choose_tile_m(m_rows, k, n, itemsize):
    sub = _sublane_multiple(itemsize)
    m_rounded = _round_up(m_rows, sub)
    # Lane-padded bytes per row for one x-tile row + one out-tile row, x2 (double buffer).
    bytes_per_row = 2 * (_round_up(k, 128) + _round_up(n, 128)) * itemsize
    tile_m = max(sub, (_BUF_BUDGET_BYTES // bytes_per_row) // sub * sub)
    # When M is large, keep grid_m >= _MIN_GRID_STEPS so the "parallel" axis can be
    # sharded across TensorCores — but never below _MIN_TILE_ROWS.
    if m_rounded > _MIN_GRID_STEPS * _MIN_TILE_ROWS:
        steps_tile = _round_up(pl.cdiv(m_rounded, _MIN_GRID_STEPS), sub)
        tile_m = min(tile_m, max(_MIN_TILE_ROWS, steps_tile))
    return min(tile_m, m_rounded)


def _pack_weight(weight, pack, compute_dtype):
    # Block-diagonal (pack*dim, pack*num_types) built once on the host so the kernel's
    # contraction dim becomes a full 128-lane K.
    num_types, dim = weight.shape
    wt = weight.T.astype(compute_dtype)  # canonical (K, N)
    wp = jnp.zeros((pack * dim, pack * num_types), compute_dtype)
    for j in range(pack):
        wp = wp.at[j * dim:(j + 1) * dim, j * num_types:(j + 1) * num_types].set(wt)
    return wp


# ----------------------------- forward ---------------------------------------

def predictor_forward(data, weight, *, tile_m=None):
    """out = data @ weight.T (no bias), matching nn.Linear(dim, num_types, bias=False).

    data:   (..., dim)
    weight: (num_types, dim)   -- PyTorch layout
    returns (..., num_types)
    """
    *lead, dim = data.shape
    num_types, wdim = weight.shape
    assert wdim == dim, "weight last dim must match data last dim"

    compute_dtype = data.dtype
    itemsize = jnp.dtype(compute_dtype).itemsize
    sub = _sublane_multiple(itemsize)

    x2d = data.reshape(-1, dim)
    M = x2d.shape[0]

    # Lane-pack small dims: (M, dim) -> (M/pack, pack*dim) is a free contiguous reshape;
    # it removes lane padding of x in VMEM and feeds the MXU a full 128-deep contraction.
    pack = 128 // dim if (dim < 128 and 128 % dim == 0) else 1
    if pack > 1:
        m_pad = _round_up(M, pack)
        if m_pad != M:
            x2d = jnp.pad(x2d, ((0, m_pad - M), (0, 0)))  # zero rows -> zero outputs, sliced off
        x_kernel = x2d.reshape(m_pad // pack, pack * dim)
        w_kernel = _pack_weight(weight, pack, compute_dtype)
    else:
        m_pad = M
        x_kernel = x2d
        w_kernel = weight.T.astype(compute_dtype)  # one-time host transpose -> canonical (K, N)

    m_rows, K = x_kernel.shape
    N = w_kernel.shape[1]

    if tile_m is None:
        tile_m = _choose_tile_m(m_rows, K, N, itemsize)
    else:
        tile_m = max(sub, (int(tile_m) // sub) * sub)
        tile_m = min(tile_m, _round_up(m_rows, sub))

    grid_m = pl.cdiv(m_rows, tile_m)

    # Explicit scoped-VMEM limit: estimated usage (lane-padded, double-buffered, + weight
    # + headroom), clamped to stay well under v7x's 64 MiB physical VMEM.
    rk, rn = _round_up(K, 128), _round_up(N, 128)
    w_itemsize = jnp.dtype(w_kernel.dtype).itemsize
    est_vmem = (2 * tile_m * (rk + rn) * itemsize
                + 2 * _round_up(K, sub) * rn * w_itemsize
                + (2 << 20))
    vmem_limit = int(min(max(est_vmem * 5 // 4, 32 << 20), 48 << 20))

    cost = pl.CostEstimate(
        flops=2 * m_rows * K * N,
        transcendentals=0,
        bytes_accessed=(m_rows * K * itemsize
                        + m_rows * N * itemsize
                        + K * N * w_itemsize),
    )

    out_kernel = pl.pallas_call(
        _predictor_kernel,
        out_shape=jax.ShapeDtypeStruct((m_rows, N), compute_dtype),
        grid_spec=pltpu.PrefetchScalarGridSpec(
            num_scalar_prefetch=0,
            grid=(grid_m,),
            in_specs=[
                pl.BlockSpec((tile_m, K), lambda i: (i, 0)),
                # Constant index_map -> the small weight is fetched once and stays resident.
                pl.BlockSpec((K, N), lambda i: (0, 0)),
            ],
            out_specs=pl.BlockSpec((tile_m, N), lambda i: (i, 0)),
        ),
        compiler_params=pltpu.CompilerParams(
            dimension_semantics=("parallel",),
            vmem_limit_bytes=vmem_limit,
        ),
        cost_estimate=cost,
    )(x_kernel, w_kernel)

    if pack > 1:
        out2d = out_kernel.reshape(m_pad, num_types)[:M]
    else:
        out2d = out_kernel

    return out2d.reshape(*lead, num_types)


def init_predictor_weight(key, dim, num_types, dtype=jnp.float32):
    # nn.init.xavier_normal_: std = gain * sqrt(2 / (fan_in + fan_out)), gain = 1
    std = math.sqrt(2.0 / (dim + num_types))
    return (std * jax.random.normal(key, (num_types, dim))).astype(dtype)


# ----------------------------- demo / checks ---------------------------------

if __name__ == "__main__":
    key = jax.random.PRNGKey(0)
    k_data, k_w = jax.random.split(key)

    # Shapes implied by the module's forward: (batch, seq, dim) -> (batch, seq, num_types)
    batch, seq, dim, num_types = 2, 8, 32, 4
    data = jax.random.normal(k_data, (batch, seq, dim), dtype=jnp.float32)
    weight = init_predictor_weight(k_w, dim, num_types)

    out = jax.block_until_ready(predictor_forward(data, weight))
    ref = data @ weight.T
    assert out.shape == (batch, seq, num_types)
    assert jnp.allclose(out, ref, atol=1e-5, rtol=1e-5)

    # Multi-step grid, partial last block, and M (=111) not divisible by the lane pack (4).
    data2 = jax.random.normal(jax.random.PRNGKey(1), (3, 37, dim), dtype=jnp.float32)
    out2 = jax.block_until_ready(predictor_forward(data2, weight, tile_m=8))
    ref2 = data2 @ weight.T
    assert out2.shape == (3, 37, num_types)
    assert jnp.allclose(out2, ref2, atol=1e-5, rtol=1e-5)

    # Non-packable dim (128 % 40 != 0) exercises the plain (M, dim) path.
    dim3 = 40
    w3 = init_predictor_weight(jax.random.PRNGKey(2), dim3, num_types)
    data3 = jax.random.normal(jax.random.PRNGKey(3), (batch, seq, dim3), dtype=jnp.float32)
    out3 = jax.block_until_ready(predictor_forward(data3, w3))
    ref3 = data3 @ w3.T
    assert out3.shape == (batch, seq, num_types)
    assert jnp.allclose(out3, ref3, atol=1e-5, rtol=1e-5)

    print("KERNEL_OK")
</pallas_src>

<mosaic_0001>
module attributes {stable_mosaic.version = 11 : i64} {
  func.func @_predictor_kernel(%arg0: i32, %arg1: memref<8x128xf32, #tpu.memory_space<vmem>>, %arg2: memref<128x16xf32, #tpu.memory_space<vmem>>, %arg3: memref<8x16xf32, #tpu.memory_space<vmem>>) attributes {dimension_semantics = [#tpu.dimension_semantics<parallel>], iteration_bounds = array<i64: 1>, scalar_prefetch = 0 : i64, scratch_operands = 0 : i64, tpu.core_type = #tpu.core_type<tc>, window_params = [{transform_indices = @transform_0, window_bounds = array<i64: 8, 128>}, {pipeline_mode = #tpu.pipeline_mode<synchronous>, transform_indices = @transform_1, window_bounds = array<i64: 128, 16>}, {transform_indices = @transform_2, window_bounds = array<i64: 8, 16>}]} {
    %c0 = arith.constant 0 : index
    %c0_0 = arith.constant 0 : index
    %0 = vector.load %arg1[%c0, %c0_0] : memref<8x128xf32, #tpu.memory_space<vmem>>, vector<8x128xf32>
    %c0_1 = arith.constant 0 : index
    %c0_2 = arith.constant 0 : index
    %1 = vector.load %arg2[%c0_1, %c0_2] : memref<128x16xf32, #tpu.memory_space<vmem>>, vector<128x16xf32>
    %cst = arith.constant dense<0.000000e+00> : vector<8x16xf32>
    %2 = tpu.matmul %0, %1, %cst {dimension_numbers = #tpu.dot_dimension_numbers<[1], [0], [0], [1], [0, 0, 1, 1], [], []>} : vector<8x128xf32>, vector<128x16xf32>, vector<8x16xf32> -> vector<8x16xf32>
    %c0_3 = arith.constant 0 : index
    %c0_4 = arith.constant 0 : index
    %3 = vector.load %arg3[%c0_3, %c0_4] : memref<8x16xf32, #tpu.memory_space<vmem>>, vector<8x16xf32>
    tpu.vector_store %arg3[%c0_3, %c0_4], %2 {strides = array<i32>} : memref<8x16xf32, #tpu.memory_space<vmem>>, vector<8x16xf32>,
    return
  }
  func.func @transform_0(%arg0: i32) -> (i32, i32) {
    %c0_i32 = arith.constant 0 : i32
    %c0_i32_0 = arith.constant 0 : i32
    return %arg0, %c0_i32 : i32, i32
  }
  func.func @transform_1(%arg0: i32) -> (i32, i32) {
    %c0_i32 = arith.constant 0 : i32
    %c0_i32_0 = arith.constant 0 : i32
    %c0_i32_1 = arith.constant 0 : i32
    return %c0_i32, %c0_i32_0 : i32, i32
  }
  func.func @transform_2(%arg0: i32) -> (i32, i32) {
    %c0_i32 = arith.constant 0 : i32
    %c0_i32_0 = arith.constant 0 : i32
    return %arg0, %c0_i32 : i32, i32
  }
}

</mosaic_0001>

<llo_original>
// kernel: tpu_custom_call.1
$region0: #{tpu_custom_call.1}
  #allocation0 [shape = 'u32[]', space=smem, size = 0x4, offset = 0x4, fixed_abs, tag = 'smem constant byte address 0x4 - core index']
  #allocation1 [shape = 'u32[144,128]{1,0:T(1,128)}', space=vmem, size = 0x12000, scoped, tag = 'internal scratch']
  %s0 = inlined_call_operand.vmem [shape: f32[4,128], index: 0, kind: input, shape index: {}]
  %s1 = inlined_call_operand.vmem [shape: f32[128,16], index: 1, kind: input, shape index: {}]
  %s2 = inlined_call_operand.hbm [shape: f32[4,16], index: 2, kind: output, shape index: {}]
  %s3 = sld [smem:[#allocation0]]
  $region18: #{tpu_custom_call.1} parent=0
    _
  %s5 = ssub.s32 1, %s3
  %s6 = scalar_select 0, %s5, %s3
  $region1: #{tpu_custom_call.1} parent=0
    #allocation2 [shape = 'u8[4096]{0}', space=vmem, size = 0x1000, scoped, tag = 'output window, operand 0, single buffered']
    #allocation3 [shape = 's32[1]{0}', space=sflag, size = 0x4, scoped, tag = 'scoped memory for tpu_custom_call.1']
    %7 = vsyncpa [#allocation3], 0
    // Predicated region
    $region2: #{tpu_custom_call.1} parent=1 // pred_check
      _
    $region3: #{tpu_custom_call.1} parent=1 // pred_check_branch
      %9 = sbr.rel (0) target = $region5
    $region4: #{tpu_custom_call.1} parent=1 // pred_region
      _
    $region5: #{tpu_custom_call.1} parent=1 // pred_fallthru
      _
    // Predicated region
    $region6: #{tpu_custom_call.1} parent=1 // pred_check
      _
    $region7: #{tpu_custom_call.1} parent=1 // pred_check_branch
      %11 = sbr.rel (0) target = $region9
    $region8: #{tpu_custom_call.1} parent=1 // pred_region
      _
    $region9: #{tpu_custom_call.1} parent=1 // pred_fallthru
      _
    %v12 = vld [vmem:[%s0] sm:$0xff]
    %v13 = vld [vmem:[%s1] sm:$0xff]
    %v14 = vld [vmem:[%s1 + $0x8] sm:$0xff]
    %v15 = vld [vmem:[%s1 + $0x10] sm:$0xff]
    %v16 = vld [vmem:[%s1 + $0x18] sm:$0xff]
    %v17 = vld [vmem:[%s1 + $0x20] sm:$0xff]
    %v18 = vld [vmem:[%s1 + $0x28] sm:$0xff]
    %v19 = vld [vmem:[%s1 + $0x30] sm:$0xff]
    %v20 = vld [vmem:[%s1 + $0x38] sm:$0xff]
    %v21 = vld [vmem:[%s1 + $0x40] sm:$0xff]
    %v22 = vld [vmem:[%s1 + $0x48] sm:$0xff]
    %v23 = vld [vmem:[%s1 + $0x50] sm:$0xff]
    %v24 = vld [vmem:[%s1 + $0x58] sm:$0xff]
    %v25 = vld [vmem:[%s1 + $0x60] sm:$0xff]
    %v26 = vld [vmem:[%s1 + $0x68] sm:$0xff]
    %v27 = vld [vmem:[%s1 + $0x70] sm:$0xff]
    %v28 = vld [vmem:[%s1 + $0x78] sm:$0xff]
    %29 = vmatprep.subr.mxu0 0.0
    %30 = vmatpush1.msra.mxu0 %v13
    %31 = vmatprep.subr.mxu0 0.0
    %32 = vmatpush1.msra.mxu0 %v14
    %33 = vmatprep.subr.mxu0 0.0
    %34 = vmatpush1.msra.mxu0 %v15
    %35 = vmatprep.subr.mxu0 0.0
    %36 = vmatpush1.msra.mxu0 %v16
    %37 = vmatprep.subr.mxu0 0.0
    %38 = vmatpush1.msra.mxu0 %v17
    %39 = vmatprep.subr.mxu0 0.0
    %40 = vmatpush1.msra.mxu0 %v18
    %41 = vmatprep.subr.mxu0 0.0
    %42 = vmatpush1.msra.mxu0 %v19
    %43 = vmatprep.subr.mxu0 0.0
    %44 = vmatpush1.msra.mxu0 %v20
    %45 = vmatprep.subr.mxu0 0.0
    %46 = vmatpush1.msra.mxu0 %v21
    %47 = vmatprep.subr.mxu0 0.0
    %48 = vmatpush1.msra.mxu0 %v22
    %49 = vmatprep.subr.mxu0 0.0
    %50 = vmatpush1.msra.mxu0 %v23
    %51 = vmatprep.subr.mxu0 0.0
    %52 = vmatpush1.msra.mxu0 %v24
    %53 = vmatprep.subr.mxu0 0.0
    %54 = vmatpush1.msra.mxu0 %v25
    %55 = vmatprep.subr.mxu0 0.0
    %56 = vmatpush1.msra.mxu0 %v26
    %57 = vmatprep.subr.mxu0 0.0
    %58 = vmatpush1.msra.mxu0 %v27
    %59 = vmatprep.subr.mxu0 0.0
    %60 = vmatpush1.msra.mxu0 %v28
    %61 = vmatprep.subr.mxu0 0.0
    %62 = vmatpush1.msra.mxu0 0.0
    %63 = vmatprep.subr.mxu0 0.0
    %64 = vmatpush1.msra.mxu0 0.0
    %65 = vmatprep.subr.mxu0 0.0
    %66 = vmatpush1.msra.mxu0 0.0
    %67 = vmatprep.subr.mxu0 0.0
    %68 = vmatpush1.msra.mxu0 0.0
    %69 = vmatprep.subr.mxu0 0.0
    %70 = vmatpush1.msra.mxu0 0.0
    %71 = vmatprep.subr.mxu0 0.0
    %72 = vmatpush1.msra.mxu0 0.0
    %73 = vmatprep.subr.mxu0 0.0
    %74 = vmatpush1.msra.mxu0 0.0
    %75 = vmatprep.subr.mxu0 0.0
    %76 = vmatpush1.msra.mxu0 0.0
    %77 = vmatprep.subr.mxu0 0.0
    %78 = vmatpush1.msra.mxu0 0.0
    %79 = vmatprep.subr.mxu0 0.0
    %80 = vmatpush1.msra.mxu0 0.0
    %81 = vmatprep.subr.mxu0 0.0
    %82 = vmatpush1.msra.mxu0 0.0
    %83 = vmatprep.subr.mxu0 0.0
    %84 = vmatpush1.msra.mxu0 0.0
    %85 = vmatprep.subr.mxu0 0.0
    %86 = vmatpush1.msra.mxu0 0.0
    %87 = vmatprep.subr.mxu0 0.0
    %88 = vmatpush1.msra.mxu0 0.0
    %89 = vmatprep.subr.mxu0 0.0
    %90 = vmatpush1.msra.mxu0 0.0
    %91 = vmatprep.subr.mxu0 0.0
    %92 = vmatpush1.msra.mxu0 0.0
    %93 = vmatprep.mubr.f32.mxu0 0.0
    %94 = vmatmul.mubr.f32.gmra.mrb[0].mxu0 %v12
    %v95 = vpop.f32.mrb[0].mxu0
    %v96 = vadd.f32 0.0, %v95
    %v97 = vpop.f32.mrb[0].mxu0
    %98 = vdwg.mxu0
    %vm99 = vcmask 130048
    %100 = vst.msk [vmem:[#allocation2] sm:$0xff] %vm99, %v96
    // Predicated region
    $region10: #{tpu_custom_call.1} parent=1 // pred_check
      _
    $region11: #{tpu_custom_call.1} parent=1 // pred_check_branch
      %102 = sbr.rel (0) target = $region13
    $region12: #{tpu_custom_call.1} parent=1 // pred_region
      %s104 = ssub.s32 128, 64
      %105 = vsyncadd [#allocation3], %s104
      %s106 = sshll.u32 [#allocation2], 4
      %s107 = int_to_ptr.vmem [resolvable:$true] %s106
      %112 = dma.vmem_to_hbm [thread:$0]  %s107, 64, %s2, [#allocation3], 64, 64, 4
    $region13: #{tpu_custom_call.1} parent=1 // pred_fallthru
      _
    // Predicated region
    $region14: #{tpu_custom_call.1} parent=1 // pred_check
      _
    $region15: #{tpu_custom_call.1} parent=1 // pred_check_branch
      %114 = sbr.rel (0) target = $region17
    $region16: #{tpu_custom_call.1} parent=1 // pred_region
      %115 = dma.done [#allocation3], 128
    $region17: #{tpu_custom_call.1} parent=1 // pred_fallthru
      _
    %116 = vsyncpa [#allocation3], 1

</llo_original>
